<compile_context>
chip_gen: v7x
topology: tpu7x:2x2x1
jax: 0.10.0
libtpu: 0.0.40
codegen_flags: <defaults>
</compile_context>

<pallas_src>
import math

import jax
import jax.numpy as jnp
from jax.experimental import pallas as pl
from jax.experimental.pallas import tpu as pltpu


def lora_linear_kernel(x_ref, w_ref, low_ref, b_ref, bias_ref, o_ref, acc_ref):
    k = pl.program_id(2)

    @pl.when(k == 0)
    def _():
        acc_ref[...] = jnp.zeros_like(acc_ref)

    # Base: x @ W^T.  W tile is [tn, tk]; contract x dim 1 with W dim 1 directly
    # (no transposed temporary), f32 accumulation on the MXU.
    acc_ref[...] += jax.lax.dot_general(
        x_ref[...], w_ref[...],
        dimension_numbers=(((1,), (1,)), ((), ())),
        preferred_element_type=jnp.float32)

    @pl.when(k == pl.num_programs(2) - 1)
    def _():
        # low is pre-scaled (x @ A * lora_scaling/r), shape [tm, r]; one tiny rank-r
        # matmul per output tile.  Bias + cast + store only happen here.
        lora = jnp.dot(low_ref[...], b_ref[...],
                       preferred_element_type=jnp.float32)     # [tm, tn]
        out = acc_ref[...] + bias_ref[...].astype(jnp.float32) + lora
        o_ref[...] = out.astype(o_ref.dtype)


def _pick_tile(dim, want, aligns=(256, 128, 8)):
    """Largest aligned tile <= want that divides dim; full dim if dim <= want or ragged."""
    if dim <= want:
        return dim
    for align in aligns:
        t = (want // align) * align
        while t >= align:
            if dim % t == 0:
                return t
            t -= align
    return dim


def lora_linear(x, weight, lora_right, lora_left, bias=None,
                *, lora_scaling=1.0, tm=512, tn=512, tk=1024):
    """LoRALinear forward.

    x: [M, K], weight: [N, K], lora_right: [K, r], lora_left: [r, N], bias: [N] or None.
    `lora_scaling` is the constructor argument of the PyTorch module; the wrapper applies
    lora_scaling / lora_dim, exactly like LoRALinear.__init__ does.
    """
    M, K = x.shape
    N, K2 = weight.shape
    assert K == K2
    Kr, r = lora_right.shape
    assert Kr == K and lora_left.shape == (r, N)

    scaling = float(lora_scaling) / float(r)   # == self.lora_scaling in the PyTorch module

    if bias is None:
        bias = jnp.zeros((N,), dtype=weight.dtype)
    bias2d = bias.reshape(1, N)

    # Hoisted low-rank projection: tiny [M, r] matmul done once outside the kernel
    # (f32 accumulate, pre-scaled on the small tensor, then back to the operand dtype).
    low = (jnp.dot(x, lora_right, preferred_element_type=jnp.float32)
           * scaling).astype(x.dtype)

    tm = _pick_tile(M, tm)
    tn = _pick_tile(N, tn)
    tk = _pick_tile(K, tk)

    # v7x megacore: if the (i, j) parallel grid collapsed to 1x1, split N so both
    # TensorCores get a tile (only when the halves stay 128-aligned).
    if (M // tm) * (N // tn) == 1:
        half = tn // 2
        if half >= 128 and half % 128 == 0 and N % half == 0:
            tn = half

    assert M % tm == 0 and N % tn == 0 and K % tk == 0
    grid = (M // tm, N // tn, K // tk)

    isz = x.dtype.itemsize
    wsz = weight.dtype.itemsize
    # Advisory cost hint for XLA scheduling around the custom call.
    cost = pl.CostEstimate(
        flops=2 * M * N * K + 2 * M * r * N,
        transcendentals=0,
        bytes_accessed=(M * K * isz * (N // tn)          # x re-read per j tile
                        + N * K * wsz * (M // tm)        # W re-read per i tile
                        + M * r * isz * (N // tn)
                        + r * N * lora_left.dtype.itemsize * (M // tm)
                        + M * N * isz))

    # Rough double-buffered VMEM footprint; raise the scoped limit only if needed,
    # capped at 48 MiB so a big user-supplied tile config stays safe on v7x (64 MiB/TC).
    est_vmem = (2 * (tm * tk * isz + tn * tk * wsz + tm * r * isz
                     + r * tn * lora_left.dtype.itemsize + tn * bias2d.dtype.itemsize
                     + tm * tn * isz)
                + tm * tn * 4)
    vmem_limit = min(max(32 << 20, int(1.5 * est_vmem)), 48 << 20)

    return pl.pallas_call(
        lora_linear_kernel,
        out_shape=jax.ShapeDtypeStruct((M, N), x.dtype),
        grid_spec=pltpu.PrefetchScalarGridSpec(
            num_scalar_prefetch=0,
            grid=grid,
            in_specs=[
                pl.BlockSpec((tm, tk), lambda i, j, k: (i, k)),   # x
                pl.BlockSpec((tn, tk), lambda i, j, k: (j, k)),   # W (native [N, K] layout)
                pl.BlockSpec((tm, r), lambda i, j, k: (i, 0)),    # low = (x @ A) * scale
                pl.BlockSpec((r, tn), lambda i, j, k: (0, j)),    # B = lora_left
                pl.BlockSpec((1, tn), lambda i, j, k: (0, j)),    # bias
            ],
            out_specs=pl.BlockSpec((tm, tn), lambda i, j, k: (i, j)),
            scratch_shapes=[
                pltpu.VMEM((tm, tn), jnp.float32),   # base-matmul f32 accumulator
            ],
        ),
        compiler_params=pltpu.CompilerParams(
            dimension_semantics=("parallel", "parallel", "arbitrary"),
            vmem_limit_bytes=vmem_limit),
        cost_estimate=cost,
    )(x, weight, low, lora_left, bias2d)


if __name__ == "__main__":
    # Small shapes implied by the forward pass (Linear applied to [batch, seq, hidden]).
    batch, seq = 2, 8
    in_features, out_features = 32, 32
    lora_dim = 4
    lora_scaling = 1.0                      # module constructor arg; wrapper divides by lora_dim

    key = jax.random.PRNGKey(0)
    k_w, k_x, k_a, k_b, k_bias = jax.random.split(key, 5)

    # Deterministic synthetic parameter init (shapes per LoRALinear.__init__).
    weight = jax.random.normal(k_w, (out_features, in_features), jnp.float32) * 0.05
    bias = jax.random.normal(k_bias, (out_features,), jnp.float32) * 0.01

    # lora_right_weight: kaiming_uniform_(a=sqrt(5)) -> U(-bound, bound), bound = 1/sqrt(fan_in).
    bound = 1.0 / math.sqrt(in_features)
    lora_right = jax.random.uniform(
        k_a, (in_features, lora_dim), jnp.float32, minval=-bound, maxval=bound
    )
    # Module init is zeros; use small random values so the LoRA path is exercised.
    lora_left = jax.random.normal(k_b, (lora_dim, out_features), jnp.float32) * 0.05

    x = jax.random.normal(k_x, (batch, seq, in_features), jnp.float32)
    x2d = x.reshape(batch * seq, in_features)

    out = lora_linear(x2d, weight, lora_right, lora_left, bias, lora_scaling=lora_scaling)
    out = jax.block_until_ready(out).reshape(batch, seq, out_features)

    # Pure-JAX reference (F.linear + LoRA branch), with the module's scale.
    scale_ref = lora_scaling / lora_dim
    ref = (
        x @ weight.T
        + bias[None, None, :]
        + (x @ lora_right @ lora_left) * scale_ref
    )

    assert out.shape == (batch, seq, out_features)
    assert out.dtype == x.dtype
    assert jnp.allclose(out, ref, atol=1e-5, rtol=1e-5), "mismatch vs reference"
    print("KERNEL_OK")
</pallas_src>

<mosaic_0001>
module attributes {stable_mosaic.version = 11 : i64} {
  func.func @lora_linear_kernel(%arg0: i32, %arg1: i32, %arg2: i32, %arg3: memref<16x32xf32, #tpu.memory_space<vmem>>, %arg4: memref<32x32xf32, #tpu.memory_space<vmem>>, %arg5: memref<16x4xf32, #tpu.memory_space<vmem>>, %arg6: memref<4x32xf32, #tpu.memory_space<vmem>>, %arg7: memref<1x32xf32, #tpu.memory_space<vmem>>, %arg8: memref<16x32xf32, #tpu.memory_space<vmem>>, %arg9: memref<16x32xf32, #tpu.memory_space<vmem>>) attributes {dimension_semantics = [#tpu.dimension_semantics<parallel>, #tpu.dimension_semantics<parallel>, #tpu.dimension_semantics<arbitrary>], iteration_bounds = array<i64: 1, 1, 1>, scalar_prefetch = 0 : i64, scratch_operands = 1 : i64, tpu.core_type = #tpu.core_type<tc>, window_params = [{transform_indices = @transform_0, window_bounds = array<i64: 16, 32>}, {transform_indices = @transform_1, window_bounds = array<i64: 32, 32>}, {transform_indices = @transform_2, window_bounds = array<i64: 16, 4>}, {transform_indices = @transform_3, window_bounds = array<i64: 4, 32>}, {transform_indices = @transform_4, window_bounds = array<i64: 1, 32>}, {transform_indices = @transform_5, window_bounds = array<i64: 16, 32>}]} {
    %c0_i32 = arith.constant 0 : i32
    %0 = arith.cmpi eq, %arg2, %c0_i32 : i32
    %1 = arith.extui %0 : i1 to i32
    %c0_i32_0 = arith.constant 0 : i32
    %2 = arith.cmpi ne, %1, %c0_i32_0 : i32
    scf.if %2 {
      %cst_10 = arith.constant 0.000000e+00 : f32
      %12 = vector.broadcast %cst_10 : f32 to vector<16x32xf32>
      %c0_11 = arith.constant 0 : index
      %c0_12 = arith.constant 0 : index
      %13 = vector.load %arg9[%c0_11, %c0_12] : memref<16x32xf32, #tpu.memory_space<vmem>>, vector<16x32xf32>
      tpu.vector_store %arg9[%c0_11, %c0_12], %12 {strides = array<i32>} : memref<16x32xf32, #tpu.memory_space<vmem>>, vector<16x32xf32>,
    } else {
    }
    %c0 = arith.constant 0 : index
    %c0_1 = arith.constant 0 : index
    %3 = vector.load %arg9[%c0, %c0_1] : memref<16x32xf32, #tpu.memory_space<vmem>>, vector<16x32xf32>
    %c0_2 = arith.constant 0 : index
    %c0_3 = arith.constant 0 : index
    %4 = vector.load %arg3[%c0_2, %c0_3] : memref<16x32xf32, #tpu.memory_space<vmem>>, vector<16x32xf32>
    %c0_4 = arith.constant 0 : index
    %c0_5 = arith.constant 0 : index
    %5 = vector.load %arg4[%c0_4, %c0_5] : memref<32x32xf32, #tpu.memory_space<vmem>>, vector<32x32xf32>
    %cst = arith.constant dense<0.000000e+00> : vector<16x32xf32>
    %6 = tpu.matmul %4, %5, %cst {dimension_numbers = #tpu.dot_dimension_numbers<[1], [1], [0], [0], [0, 0, 1, 0], [], []>} : vector<16x32xf32>, vector<32x32xf32>, vector<16x32xf32> -> vector<16x32xf32>
    %7 = arith.addf %3, %6 : vector<16x32xf32>
    %c0_6 = arith.constant 0 : index
    %c0_7 = arith.constant 0 : index
    %8 = vector.load %arg9[%c0_6, %c0_7] : memref<16x32xf32, #tpu.memory_space<vmem>>, vector<16x32xf32>
    tpu.vector_store %arg9[%c0_6, %c0_7], %7 {strides = array<i32>} : memref<16x32xf32, #tpu.memory_space<vmem>>, vector<16x32xf32>,
    %c0_i32_8 = arith.constant 0 : i32
    %9 = arith.cmpi eq, %arg2, %c0_i32_8 : i32
    %10 = arith.extui %9 : i1 to i32
    %c0_i32_9 = arith.constant 0 : i32
    %11 = arith.cmpi ne, %10, %c0_i32_9 : i32
    scf.if %11 {
      %c0_10 = arith.constant 0 : index
      %c0_11 = arith.constant 0 : index
      %12 = vector.load %arg5[%c0_10, %c0_11] : memref<16x4xf32, #tpu.memory_space<vmem>>, vector<16x4xf32>
      %c0_12 = arith.constant 0 : index
      %c0_13 = arith.constant 0 : index
      %13 = vector.load %arg6[%c0_12, %c0_13] : memref<4x32xf32, #tpu.memory_space<vmem>>, vector<4x32xf32>
      %cst_14 = arith.constant dense<0.000000e+00> : vector<16x32xf32>
      %14 = tpu.matmul %12, %13, %cst_14 {dimension_numbers = #tpu.dot_dimension_numbers<[1], [0], [0], [1], [0, 0, 1, 1], [], []>} : vector<16x4xf32>, vector<4x32xf32>, vector<16x32xf32> -> vector<16x32xf32>
      %c0_15 = arith.constant 0 : index
      %c0_16 = arith.constant 0 : index
      %15 = vector.load %arg9[%c0_15, %c0_16] : memref<16x32xf32, #tpu.memory_space<vmem>>, vector<16x32xf32>
      %c0_17 = arith.constant 0 : index
      %c0_18 = arith.constant 0 : index
      %16 = vector.load %arg7[%c0_17, %c0_18] : memref<1x32xf32, #tpu.memory_space<vmem>>, vector<1x32xf32>
      %17 = vector.broadcast %16 : vector<1x32xf32> to vector<16x32xf32>
      %18 = arith.addf %15, %17 : vector<16x32xf32>
      %19 = arith.addf %18, %14 : vector<16x32xf32>
      %c0_19 = arith.constant 0 : index
      %c0_20 = arith.constant 0 : index
      %20 = vector.load %arg8[%c0_19, %c0_20] : memref<16x32xf32, #tpu.memory_space<vmem>>, vector<16x32xf32>
      tpu.vector_store %arg8[%c0_19, %c0_20], %19 {strides = array<i32>} : memref<16x32xf32, #tpu.memory_space<vmem>>, vector<16x32xf32>,
    } else {
    }
    return
  }
  func.func @transform_0(%arg0: i32, %arg1: i32, %arg2: i32) -> (i32, i32) {
    %c0_i32 = arith.constant 0 : i32
    return %arg0, %arg2 : i32, i32
  }
  func.func @transform_1(%arg0: i32, %arg1: i32, %arg2: i32) -> (i32, i32) {
    %c0_i32 = arith.constant 0 : i32
    return %arg1, %arg2 : i32, i32
  }
  func.func @transform_2(%arg0: i32, %arg1: i32, %arg2: i32) -> (i32, i32) {
    %c0_i32 = arith.constant 0 : i32
    %c0_i32_0 = arith.constant 0 : i32
    return %arg0, %c0_i32 : i32, i32
  }
  func.func @transform_3(%arg0: i32, %arg1: i32, %arg2: i32) -> (i32, i32) {
    %c0_i32 = arith.constant 0 : i32
    %c0_i32_0 = arith.constant 0 : i32
    return %c0_i32, %arg1 : i32, i32
  }
  func.func @transform_4(%arg0: i32, %arg1: i32, %arg2: i32) -> (i32, i32) {
    %c0_i32 = arith.constant 0 : i32
    %c0_i32_0 = arith.constant 0 : i32
    return %c0_i32, %arg1 : i32, i32
  }
  func.func @transform_5(%arg0: i32, %arg1: i32, %arg2: i32) -> (i32, i32) {
    %c0_i32 = arith.constant 0 : i32
    return %arg0, %arg1 : i32, i32
  }
}

</mosaic_0001>

<llo_original>
// kernel: tpu_custom_call.1
$region0: #{tpu_custom_call.1}
  #allocation0 [shape = 'u32[]', space=smem, size = 0x4, offset = 0x4, fixed_abs, tag = 'smem constant byte address 0x4 - core index']
  #allocation1 [shape = 'u32[144,128]{1,0:T(1,128)}', space=vmem, size = 0x12000, scoped, tag = 'internal scratch']
  #allocation2 [shape = 'f32[16,32]{1,0:T(8,128)}', space=vmem, size = 0x2000, scoped, tag = 'scratch operand']
  %s0 = inlined_call_operand.vmem [shape: f32[16,32], index: 0, kind: input, shape index: {}]
  %s1 = inlined_call_operand.hbm [shape: f32[32,32], index: 1, kind: input, shape index: {}]
  %s2 = inlined_call_operand.vmem [shape: f32[16,4], index: 2, kind: input, shape index: {}]
  %s3 = inlined_call_operand.vmem [shape: f32[4,32], index: 3, kind: input, shape index: {}]
  %s4 = inlined_call_operand.vmem [shape: f32[1,32], index: 4, kind: input, shape index: {}]
  %s5 = inlined_call_operand.hbm [shape: f32[16,32], index: 5, kind: output, shape index: {}]
  %s6 = sld [smem:[#allocation0]]
  $region42: #{tpu_custom_call.1} parent=0
    _
  %s8 = ssub.s32 1, %s6
  %s9 = scalar_select 0, %s8, %s6
  $region1: #{tpu_custom_call.1} parent=0
    #allocation3 [shape = 'u8[16384]{0}', space=vmem, size = 0x4000, scoped, tag = 'input window, operand 1, single buffered']
    #allocation4 [shape = 's32[1]{0}', space=sflag, size = 0x4, scoped, tag = 'scoped memory for tpu_custom_call.1']
    #allocation5 [shape = 's32[1]{0}', space=sflag, size = 0x4, scoped, tag = 'scoped memory for tpu_custom_call.1']
    #allocation6 [shape = 'u8[8192]{0}', space=vmem, size = 0x2000, scoped, tag = 'output window, operand 0, single buffered']
    %10 = vsyncpa [#allocation4], 0
    %11 = vsyncpa [#allocation5], 0
    // Predicated region
    $region2: #{tpu_custom_call.1} parent=1 // pred_check
      _
    $region3: #{tpu_custom_call.1} parent=1 // pred_check_branch
      %13 = sbr.rel (0) target = $region5
    $region4: #{tpu_custom_call.1} parent=1 // pred_region
      _
    $region5: #{tpu_custom_call.1} parent=1 // pred_fallthru
      _
    // Predicated region
    $region6: #{tpu_custom_call.1} parent=1 // pred_check
      _
    $region7: #{tpu_custom_call.1} parent=1 // pred_check_branch
      %15 = sbr.rel (0) target = $region9
    $region8: #{tpu_custom_call.1} parent=1 // pred_region
      %s17 = ssub.s32 512, 512
      %18 = vsyncadd [#allocation4], %s17
      %s19 = sshll.u32 [#allocation3], 4
      %s20 = int_to_ptr.vmem [resolvable:$true] %s19
      %25 = dma.hbm_to_vmem [thread:$0]  %s1, 512, %s20, [#allocation4], 128, 128, 8
    $region9: #{tpu_custom_call.1} parent=1 // pred_fallthru
      _
    // Predicated region
    $region10: #{tpu_custom_call.1} parent=1 // pred_check
      _
    $region11: #{tpu_custom_call.1} parent=1 // pred_check_branch
      %27 = sbr.rel (0) target = $region13
    $region12: #{tpu_custom_call.1} parent=1 // pred_region
      _
    $region13: #{tpu_custom_call.1} parent=1 // pred_fallthru
      _
    // Predicated region
    $region14: #{tpu_custom_call.1} parent=1 // pred_check
      _
    $region15: #{tpu_custom_call.1} parent=1 // pred_check_branch
      %29 = sbr.rel (0) target = $region17
    $region16: #{tpu_custom_call.1} parent=1 // pred_region
      _
    $region17: #{tpu_custom_call.1} parent=1 // pred_fallthru
      _
    // Predicated region
    $region18: #{tpu_custom_call.1} parent=1 // pred_check
      _
    $region19: #{tpu_custom_call.1} parent=1 // pred_check_branch
      %31 = sbr.rel (0) target = $region21
    $region20: #{tpu_custom_call.1} parent=1 // pred_region
      _
    $region21: #{tpu_custom_call.1} parent=1 // pred_fallthru
      _
    // Predicated region
    $region22: #{tpu_custom_call.1} parent=1 // pred_check
      _
    $region23: #{tpu_custom_call.1} parent=1 // pred_check_branch
      %33 = sbr.rel (0) target = $region25
    $region24: #{tpu_custom_call.1} parent=1 // pred_region
      %34 = dma.done [#allocation4], 512
    $region25: #{tpu_custom_call.1} parent=1 // pred_fallthru
      _
    %p35 = scmp.eq.s32.totalorder 0, 0
    // Predicated region
    $region26: #{tpu_custom_call.1} parent=1 // pred_check
      %p36 = pneg %p35
    $region27: #{tpu_custom_call.1} parent=1 // pred_check_branch
      %38 = sbr.rel (%p36) target = $region29
    $region28: #{tpu_custom_call.1} parent=1 // pred_region
      %vm39 = vcmask 261120
      %40 = vst.msk [vmem:[#allocation2] sm:$0xff] %vm39, 0.0
      %41 = vst.msk [vmem:[#allocation2 + $0x8] sm:$0xff] %vm39, 0.0
    $region29: #{tpu_custom_call.1} parent=1 // pred_fallthru
      _
    %v42 = vld [vmem:[#allocation2] sm:$0xff]
    %v43 = vld [vmem:[#allocation2 + $0x8] sm:$0xff]
    %v44 = vld [vmem:[%s0] sm:$0xff]
    %v45 = vld [vmem:[%s0 + $0x8] sm:$0xff]
    %v46 = vld [vmem:[#allocation3] sm:$0xff]
    %v47 = vld [vmem:[#allocation3 + $0x8] sm:$0xff]
    %v48 = vld [vmem:[#allocation3 + $0x10] sm:$0xff]
    %v49 = vld [vmem:[#allocation3 + $0x18] sm:$0xff]
    %vm50 = vcmask 261120
    %v52 = vsel %vm50, %v44, 0
    %v55 = vsel %vm50, %v45, 0
    %v58 = vsel %vm50, %v46, 0
    %v61 = vsel %vm50, %v47, 0
    %v64 = vsel %vm50, %v48, 0
    %v67 = vsel %vm50, %v49, 0
    %69 = vmatprep.subr.mxu0 0.0
    %70 = vmatpush1.xpose.msra.mxu0 %v58
    %71 = vmatprep.subr.mxu0 0.0
    %72 = vmatpush1.xpose.msra.mxu0 %v61
    %73 = vmatprep.subr.mxu0 0.0
    %74 = vmatpush1.xpose.msra.mxu0 %v64
    %75 = vmatprep.subr.mxu0 0.0
    %76 = vmatpush1.xpose.msra.mxu0 %v67
    %77 = vmatprep.subr.mxu0 0.0
    %78 = vmatpush1.xpose.msra.mxu0 0.0
    %79 = vmatprep.subr.mxu0 0.0
    %80 = vmatpush1.xpose.msra.mxu0 0.0
    %81 = vmatprep.subr.mxu0 0.0
    %82 = vmatpush1.xpose.msra.mxu0 0.0
    %83 = vmatprep.subr.mxu0 0.0
    %84 = vmatpush1.xpose.msra.mxu0 0.0
    %85 = vmatprep.subr.mxu0 0.0
    %86 = vmatpush1.xpose.msra.mxu0 0.0
    %87 = vmatprep.subr.mxu0 0.0
    %88 = vmatpush1.xpose.msra.mxu0 0.0
    %89 = vmatprep.subr.mxu0 0.0
    %90 = vmatpush1.xpose.msra.mxu0 0.0
    %91 = vmatprep.subr.mxu0 0.0
    %92 = vmatpush1.xpose.msra.mxu0 0.0
    %93 = vmatprep.subr.mxu0 0.0
    %94 = vmatpush1.xpose.msra.mxu0 0.0
    %95 = vmatprep.subr.mxu0 0.0
    %96 = vmatpush1.xpose.msra.mxu0 0.0
    %97 = vmatprep.subr.mxu0 0.0
    %98 = vmatpush1.xpose.msra.mxu0 0.0
    %99 = vmatprep.subr.mxu0 0.0
    %100 = vmatpush1.xpose.msra.mxu0 0.0
    %101 = vmatprep.subr.mxu0 0.0
    %102 = vmatpush1.xpose.msra.mxu0 0.0
    %103 = vmatprep.subr.mxu0 0.0
    %104 = vmatpush1.xpose.msra.mxu0 0.0
    %105 = vmatprep.subr.mxu0 0.0
    %106 = vmatpush1.xpose.msra.mxu0 0.0
    %107 = vmatprep.subr.mxu0 0.0
    %108 = vmatpush1.xpose.msra.mxu0 0.0
    %109 = vmatprep.subr.mxu0 0.0
    %110 = vmatpush1.xpose.msra.mxu0 0.0
    %111 = vmatprep.subr.mxu0 0.0
    %112 = vmatpush1.xpose.msra.mxu0 0.0
    %113 = vmatprep.subr.mxu0 0.0
    %114 = vmatpush1.xpose.msra.mxu0 0.0
    %115 = vmatprep.subr.mxu0 0.0
    %116 = vmatpush1.xpose.msra.mxu0 0.0
    %117 = vmatprep.subr.mxu0 0.0
    %118 = vmatpush1.xpose.msra.mxu0 0.0
    %119 = vmatprep.subr.mxu0 0.0
    %120 = vmatpush1.xpose.msra.mxu0 0.0
    %121 = vmatprep.subr.mxu0 0.0
    %122 = vmatpush1.xpose.msra.mxu0 0.0
    %123 = vmatprep.subr.mxu0 0.0
    %124 = vmatpush1.xpose.msra.mxu0 0.0
    %125 = vmatprep.subr.mxu0 0.0
    %126 = vmatpush1.xpose.msra.mxu0 0.0
    %127 = vmatprep.subr.mxu0 0.0
    %128 = vmatpush1.xpose.msra.mxu0 0.0
    %129 = vmatprep.subr.mxu0 0.0
    %130 = vmatpush1.xpose.msra.mxu0 0.0
    %131 = vmatprep.subr.mxu0 0.0
    %132 = vmatpush1.xpose.msra.mxu0 0.0
    %133 = vmatprep.mubr.f32.mxu0 0.0
    %134 = vmatmul.mubr.f32.gmra.mrb[0].mxu0 %v52
    %v135 = vpop.f32.mrb[0].mxu0
    %v136 = vadd.f32 0.0, %v135
    %v137 = vpop.f32.mrb[0].mxu0
    %138 = vmatprep.mubr.f32.mxu0 0.0
    %139 = vmatmul.mubr.f32.gmra.mrb[0].mxu0 %v55
    %v140 = vpop.f32.mrb[0].mxu0
    %v141 = vadd.f32 0.0, %v140
    %v142 = vpop.f32.mrb[0].mxu0
    %143 = vdwg.mxu0
    %v144 = vadd.f32 %v42, %v136
    %v145 = vadd.f32 %v43, %v141
    %146 = vst.msk [vmem:[#allocation2] sm:$0xff] %vm50, %v144
    %147 = vst.msk [vmem:[#allocation2 + $0x8] sm:$0xff] %vm50, %v145
    // Predicated region
    $region30: #{tpu_custom_call.1} parent=1 // pred_check
      %p148 = pneg %p35
    $region31: #{tpu_custom_call.1} parent=1 // pred_check_branch
      %150 = sbr.rel (%p148) target = $region33
    $region32: #{tpu_custom_call.1} parent=1 // pred_region
      %v151 = vld [vmem:[%s2] sm:$0xff]
      %v152 = vld [vmem:[%s2 + $0x8] sm:$0xff]
      %v153 = vld [vmem:[%s3] sm:$0xf]
      %vm154 = vcmask 31744
      %v156 = vsel %vm154, %v151, 0
      %v159 = vsel %vm154, %v152, 0
      %vm161 = vcmask 1043456
      %v163 = vsel %vm161, %v153, 0
      %165 = vmatprep.subr.mxu0 0.0
      %166 = vmatpush1.msra.mxu0 %v163
      %167 = vmatprep.subr.mxu0 0.0
      %168 = vmatpush1.msra.mxu0 0.0
      %169 = vmatprep.subr.mxu0 0.0
      %170 = vmatpush1.msra.mxu0 0.0
      %171 = vmatprep.subr.mxu0 0.0
      %172 = vmatpush1.msra.mxu0 0.0
      %173 = vmatprep.subr.mxu0 0.0
      %174 = vmatpush1.msra.mxu0 0.0
      %175 = vmatprep.subr.mxu0 0.0
      %176 = vmatpush1.msra.mxu0 0.0
      %177 = vmatprep.subr.mxu0 0.0
      %178 = vmatpush1.msra.mxu0 0.0
      %179 = vmatprep.subr.mxu0 0.0
      %180 = vmatpush1.msra.mxu0 0.0
      %181 = vmatprep.subr.mxu0 0.0
      %182 = vmatpush1.msra.mxu0 0.0
      %183 = vmatprep.subr.mxu0 0.0
      %184 = vmatpush1.msra.mxu0 0.0
      %185 = vmatprep.subr.mxu0 0.0
      %186 = vmatpush1.msra.mxu0 0.0
      %187 = vmatprep.subr.mxu0 0.0
      %188 = vmatpush1.msra.mxu0 0.0
      %189 = vmatprep.subr.mxu0 0.0
      %190 = vmatpush1.msra.mxu0 0.0
      %191 = vmatprep.subr.mxu0 0.0
      %192 = vmatpush1.msra.mxu0 0.0
      %193 = vmatprep.subr.mxu0 0.0
      %194 = vmatpush1.msra.mxu0 0.0
      %195 = vmatprep.subr.mxu0 0.0
      %196 = vmatpush1.msra.mxu0 0.0
      %197 = vmatprep.subr.mxu0 0.0
      %198 = vmatpush1.msra.mxu0 0.0
      %199 = vmatprep.subr.mxu0 0.0
      %200 = vmatpush1.msra.mxu0 0.0
      %201 = vmatprep.subr.mxu0 0.0
      %202 = vmatpush1.msra.mxu0 0.0
      %203 = vmatprep.subr.mxu0 0.0
      %204 = vmatpush1.msra.mxu0 0.0
      %205 = vmatprep.subr.mxu0 0.0
      %206 = vmatpush1.msra.mxu0 0.0
      %207 = vmatprep.subr.mxu0 0.0
      %208 = vmatpush1.msra.mxu0 0.0
      %209 = vmatprep.subr.mxu0 0.0
      %210 = vmatpush1.msra.mxu0 0.0
      %211 = vmatprep.subr.mxu0 0.0
      %212 = vmatpush1.msra.mxu0 0.0
      %213 = vmatprep.subr.mxu0 0.0
      %214 = vmatpush1.msra.mxu0 0.0
      %215 = vmatprep.subr.mxu0 0.0
      %216 = vmatpush1.msra.mxu0 0.0
      %217 = vmatprep.subr.mxu0 0.0
      %218 = vmatpush1.msra.mxu0 0.0
      %219 = vmatprep.subr.mxu0 0.0
      %220 = vmatpush1.msra.mxu0 0.0
      %221 = vmatprep.subr.mxu0 0.0
      %222 = vmatpush1.msra.mxu0 0.0
      %223 = vmatprep.subr.mxu0 0.0
      %224 = vmatpush1.msra.mxu0 0.0
      %225 = vmatprep.subr.mxu0 0.0
      %226 = vmatpush1.msra.mxu0 0.0
      %227 = vmatprep.subr.mxu0 0.0
      %228 = vmatpush1.msra.mxu0 0.0
      %229 = vmatprep.mubr.f32.mxu0 0.0
      %230 = vmatmul.mubr.f32.gmra.mrb[0].mxu0 %v156
      %v231 = vpop.f32.mrb[0].mxu0
      %v232 = vadd.f32 0.0, %v231
      %v233 = vpop.f32.mrb[0].mxu0
      %234 = vmatprep.mubr.f32.mxu0 0.0
      %235 = vmatmul.mubr.f32.gmra.mrb[0].mxu0 %v159
      %v236 = vpop.f32.mrb[0].mxu0
      %v237 = vadd.f32 0.0, %v236
      %v238 = vpop.f32.mrb[0].mxu0
      %239 = vdwg.mxu0
      %v240 = vld [vmem:[#allocation2] sm:$0xff]
      %v241 = vld [vmem:[#allocation2 + $0x8] sm:$0xff]
      %v242 = vld [vmem:[%s4] sm:$0x1]
      %v244 = vlaneseq
      %v245 = vshrl.u32 %v244, 7
      %v246 = vsub.s32 0, %v245
      %v247 = vrot.slane %v242, %v246
      %v249 = vadd.f32 %v240, %v247
      %v250 = vadd.f32 %v241, %v247
      %v251 = vadd.f32 %v249, %v232
      %v252 = vadd.f32 %v250, %v237
      %253 = vst.msk [vmem:[#allocation6] sm:$0xff] %vm50, %v251
      %254 = vst.msk [vmem:[#allocation6 + $0x8] sm:$0xff] %vm50, %v252
    $region33: #{tpu_custom_call.1} parent=1 // pred_fallthru
      _
    // Predicated region
    $region34: #{tpu_custom_call.1} parent=1 // pred_check
      _
    $region35: #{tpu_custom_call.1} parent=1 // pred_check_branch
      %256 = sbr.rel (0) target = $region37
    $region36: #{tpu_custom_call.1} parent=1 // pred_region
      %s258 = ssub.s32 256, 256
      %259 = vsyncadd [#allocation5], %s258
      %s260 = sshll.u32 [#allocation6], 4
      %s261 = int_to_ptr.vmem [resolvable:$true] %s260
      %266 = dma.vmem_to_hbm [thread:$0]  %s261, 256, %s5, [#allocation5], 128, 128, 8
    $region37: #{tpu_custom_call.1} parent=1 // pred_fallthru
      _
    // Predicated region
    $region38: #{tpu_custom_call.1} parent=1 // pred_check
      _
    $region39: #{tpu_custom_call.1} parent=1 // pred_check_branch
      %268 = sbr.rel (0) target = $region41
    $region40: #{tpu_custom_call.1} parent=1 // pred_region
      %269 = dma.done [#allocation5], 256
    $region41: #{tpu_custom_call.1} parent=1 // pred_fallthru
      _
    %270 = vsyncpa [#allocation4], 1
    %271 = vsyncpa [#allocation5], 1

</llo_original>
